<compile_context>
chip_gen: v6e
topology: v6e:2x2x1
jax: 0.10.0
libtpu: 0.0.40
codegen_flags: <defaults>
</compile_context>

<pallas_src>
import jax
import jax.numpy as jnp
from jax.experimental import pallas as pl
from jax.experimental.pallas import tpu as pltpu


def _round_up(x, m):
    return (x + m - 1) // m * m


# ---------------------------------------------------------------------------
# Kernel
# ---------------------------------------------------------------------------
def ffn_kernel(x_ref, w1_ref, b1_ref, w2_ref, b2_ref, o_ref, acc_ref, xbf_ref):
    k = pl.program_id(1)

    @pl.when(k == 0)
    def _():
        acc_ref[...] = jnp.zeros_like(acc_ref)
        # Cast the resident x tile to bf16 once per row tile (not per H chunk).
        xbf_ref[...] = x_ref[...].astype(jnp.bfloat16)

    # First matmul: (tm, Dp) @ (Dp, th) in bf16, f32 accumulate on the MXU.
    h = jnp.dot(xbf_ref[...], w1_ref[...], preferred_element_type=jnp.float32)
    h = jnp.maximum(h + b1_ref[...], 0.0)                 # bias + ReLU in f32

    # Second matmul: (tm, th) @ (th, Dp), accumulated over H chunks in f32.
    acc_ref[...] += jnp.dot(h.astype(jnp.bfloat16), w2_ref[...],
                            preferred_element_type=jnp.float32)

    @pl.when(k == pl.num_programs(1) - 1)
    def _():
        y = acc_ref[...] + b2_ref[...] + x_ref[...].astype(jnp.float32)
        o_ref[...] = y.astype(o_ref.dtype)


# ---------------------------------------------------------------------------
# One-time parameter preparation (hoisted out of the per-call wrapper)
# ---------------------------------------------------------------------------
def prep_ffn_params(w1, b1, w2, b2, *, th=512):
    """w1: (D, H); b1: (H,); w2: (H, D); b2: (D,). Pads + casts once."""
    D, H = w1.shape
    Dp = _round_up(D, 128)
    Hp0 = _round_up(H, 128)
    th_eff = min(_round_up(th, 128), Hp0)
    Hp = _round_up(Hp0, th_eff)

    w1p = jnp.pad(w1, ((0, Dp - D), (0, Hp - H))).astype(jnp.bfloat16)
    w2p = jnp.pad(w2, ((0, Hp - H), (0, Dp - D))).astype(jnp.bfloat16)
    b1p = jnp.pad(b1.astype(jnp.float32), (0, Hp - H)).reshape(1, Hp)
    b2p = jnp.pad(b2.astype(jnp.float32), (0, Dp - D)).reshape(1, Dp)
    return {"w1": w1p, "b1": b1p, "w2": w2p, "b2": b2p,
            "D": D, "H": H, "Dp": Dp, "Hp": Hp, "th": th_eff}


# ---------------------------------------------------------------------------
# Tiling helpers
# ---------------------------------------------------------------------------
def _vmem_budget_bytes():
    cap = None
    try:
        info = pltpu.get_tpu_info()
        cap = getattr(info, "vmem_capacity_bytes", None)
    except Exception:
        cap = None
    if not cap or cap <= 0:
        cap = 64 * 1024 * 1024          # conservative (v7x-sized) fallback
    return int(cap) * 3 // 4            # headroom for compiler-internal scratch


def _vmem_est(tm, th, Dp, x_bytes, out_bytes):
    return (2 * tm * Dp * x_bytes            # double-buffered x tile
            + 2 * tm * Dp * out_bytes        # double-buffered output tile
            + 2 * 2 * (Dp * th + th * Dp)    # double-buffered bf16 W1/W2 chunks
            + tm * Dp * 4                    # f32 accumulator scratch
            + tm * Dp * 2                    # bf16 x scratch
            + 2 * (th * 4 + Dp * 4))         # bias chunks


_TM_CANDIDATES = (1024, 768, 512, 384, 256, 128)


def _pick_tm(M, target):
    """Largest MXU-friendly row tile with <=15% zero-row padding."""
    Mr = _round_up(max(M, 1), 8)
    for cand in _TM_CANDIDATES:
        if cand > target or cand > Mr:
            continue
        Mp = _round_up(Mr, cand)
        if (Mp - M) * 100 <= 15 * Mp:
            return cand
    return min(Mr, _round_up(target, 8))


# ---------------------------------------------------------------------------
# Wrapper
# ---------------------------------------------------------------------------
def ffn_pallas(x, params, *, tm_target=1024):
    """x: (B, S, D); params: output of prep_ffn_params."""
    D, Dp, Hp = params["D"], params["Dp"], params["Hp"]
    th = params["th"]
    B, S, Dx = x.shape
    assert Dx == D, f"input_dim mismatch: {Dx} vs {D}"
    M = B * S

    x_bytes = jnp.dtype(x.dtype).itemsize
    out_bytes = x_bytes
    budget = _vmem_budget_bytes()

    tm = _pick_tm(M, tm_target)

    # v7x has two TensorCores; make sure the 'parallel' row axis has >= 2
    # steps when there is enough work to split (small-VMEM chip heuristic).
    Mr = _round_up(M, 8)
    if budget <= 56 * 1024 * 1024 and Mr >= 256 and Mr <= tm:
        tm = max(128, _round_up((Mr + 1) // 2, 128))

    # Shrink th, then tm, until the tile working set fits the VMEM budget.
    while _vmem_est(tm, th, Dp, x_bytes, out_bytes) > budget:
        if th > 128 and th % 2 == 0 and Hp % (th // 2) == 0:
            th //= 2
        elif tm > 128:
            tm = max(128, _round_up(tm // 2, 128))
        else:
            break
    vmem_est = _vmem_est(tm, th, Dp, x_bytes, out_bytes)

    Mp = _round_up(M, tm)
    grid = (Mp // tm, Hp // th)

    x2 = x.reshape(M, D)
    if Mp != M or Dp != D:
        x2 = jnp.pad(x2, ((0, Mp - M), (0, Dp - D)))

    flops = 4 * Mp * Dp * Hp                        # two matmuls, 2*M*D*H each
    bytes_accessed = (Mp * Dp * x_bytes                       # x
                      + grid[0] * 2 * (Dp * Hp + Hp * Dp)     # bf16 W1/W2, re-streamed per row tile
                      + grid[0] * 4 * (Hp + Dp)               # biases, re-streamed per row tile
                      + Mp * Dp * out_bytes)                  # output

    # Never clamp below the estimate; stay within the per-chip budget.
    vmem_limit = int(min(budget, max(vmem_est * 5 // 4, 32 * 1024 * 1024)))
    vmem_limit = max(vmem_limit, vmem_est)

    out = pl.pallas_call(
        ffn_kernel,
        out_shape=jax.ShapeDtypeStruct((Mp, Dp), x.dtype),
        grid_spec=pltpu.PrefetchScalarGridSpec(
            num_scalar_prefetch=0,
            grid=grid,
            in_specs=[
                pl.BlockSpec((tm, Dp), lambda i, k: (i, 0)),   # x rows (resident over k)
                pl.BlockSpec((Dp, th), lambda i, k: (0, k)),   # W1 H-chunk
                pl.BlockSpec((1, th), lambda i, k: (0, k)),    # b1 H-chunk
                pl.BlockSpec((th, Dp), lambda i, k: (k, 0)),   # W2 H-chunk
                pl.BlockSpec((1, Dp), lambda i, k: (0, 0)),    # b2
            ],
            out_specs=pl.BlockSpec((tm, Dp), lambda i, k: (i, 0)),
            scratch_shapes=[pltpu.VMEM((tm, Dp), jnp.float32),    # f32 accumulator
                            pltpu.VMEM((tm, Dp), jnp.bfloat16)],  # bf16 x (cast once per row tile)
        ),
        compiler_params=pltpu.CompilerParams(
            dimension_semantics=("parallel", "arbitrary"),
            vmem_limit_bytes=vmem_limit),
        cost_estimate=pl.CostEstimate(
            flops=flops, transcendentals=0, bytes_accessed=bytes_accessed),
    )(x2, params["w1"], params["b1"], params["w2"], params["b2"])

    return out[:M, :D].reshape(B, S, D)


# ---------------------------------------------------------------------------
# References
# ---------------------------------------------------------------------------
def ffn_ref_f32(x, w1, b1, w2, b2):
    h = jnp.maximum(jnp.dot(x, w1) + b1, 0.0)
    return x + (jnp.dot(h, w2) + b2)


def ffn_ref_bf16(x, w1, b1, w2, b2):
    # Emulates the kernel's bf16-matmul / f32-accumulate numerics.
    h = jnp.dot(x.astype(jnp.bfloat16), w1.astype(jnp.bfloat16),
                preferred_element_type=jnp.float32) + b1
    h = jnp.maximum(h, 0.0)
    y = jnp.dot(h.astype(jnp.bfloat16), w2.astype(jnp.bfloat16),
                preferred_element_type=jnp.float32) + b2
    return x.astype(jnp.float32) + y


if __name__ == "__main__":
    B, S, D, H = 2, 8, 32, 64   # batch, seq_len, input_dim, hidden_dim
    key = jax.random.PRNGKey(0)
    kx, kw1, kb1, kw2, kb2 = jax.random.split(key, 5)

    x = jax.random.normal(kx, (B, S, D), dtype=jnp.float32)

    # PyTorch nn.Linear stores weight as (out, in); generate that way then
    # transpose to the (in, out) layout the kernel consumes.
    bound1 = 1.0 / (D ** 0.5)
    w1_t = jax.random.uniform(kw1, (H, D), minval=-bound1, maxval=bound1)
    b1 = jax.random.uniform(kb1, (H,), minval=-bound1, maxval=bound1)
    bound2 = 1.0 / (H ** 0.5)
    w2_t = jax.random.uniform(kw2, (D, H), minval=-bound2, maxval=bound2)
    b2 = jax.random.uniform(kb2, (D,), minval=-bound2, maxval=bound2)

    w1 = w1_t.T  # (D, H)
    w2 = w2_t.T  # (H, D)

    # One-time parameter prep (pad + bf16 cast hoisted out of the call path).
    params = prep_ffn_params(w1, b1, w2, b2)

    y = ffn_pallas(x, params)
    jax.block_until_ready(y)
    assert y.shape == (B, S, D)

    # Tight check against a reference using the same bf16-matmul numerics.
    y_bf16 = ffn_ref_bf16(x, w1, b1, w2, b2)
    assert jnp.allclose(y, y_bf16, atol=1e-3, rtol=1e-3), "mismatch vs bf16 reference"

    # Looser check against the pure-f32 PyTorch-equivalent reference
    # (bf16 matmul inputs introduce ~1e-2-scale differences).
    y_f32 = ffn_ref_f32(x, w1, b1, w2, b2)
    assert jnp.allclose(y, y_f32, atol=5e-2, rtol=5e-2), "mismatch vs f32 reference"

    print("KERNEL_OK")
</pallas_src>

<mosaic_0001>
module attributes {stable_mosaic.version = 11 : i64} {
  func.func @ffn_kernel(%arg0: i32, %arg1: i32, %arg2: memref<16x128xf32, #tpu.memory_space<vmem>>, %arg3: memref<128x128xbf16, #tpu.memory_space<vmem>>, %arg4: memref<1x128xf32, #tpu.memory_space<vmem>>, %arg5: memref<128x128xbf16, #tpu.memory_space<vmem>>, %arg6: memref<1x128xf32, #tpu.memory_space<vmem>>, %arg7: memref<16x128xf32, #tpu.memory_space<vmem>>, %arg8: memref<16x128xf32, #tpu.memory_space<vmem>>, %arg9: memref<16x128xbf16, #tpu.memory_space<vmem>>) attributes {dimension_semantics = [#tpu.dimension_semantics<parallel>, #tpu.dimension_semantics<arbitrary>], iteration_bounds = array<i64: 1, 1>, scalar_prefetch = 0 : i64, scratch_operands = 2 : i64, tpu.core_type = #tpu.core_type<tc>, window_params = [{transform_indices = @transform_0, window_bounds = array<i64: 16, 128>}, {transform_indices = @transform_1, window_bounds = array<i64: 128, 128>}, {transform_indices = @transform_2, window_bounds = array<i64: 1, 128>}, {transform_indices = @transform_3, window_bounds = array<i64: 128, 128>}, {pipeline_mode = #tpu.pipeline_mode<synchronous>, transform_indices = @transform_4, window_bounds = array<i64: 1, 128>}, {transform_indices = @transform_5, window_bounds = array<i64: 16, 128>}]} {
    %c0_i32 = arith.constant 0 : i32
    %0 = arith.cmpi eq, %arg1, %c0_i32 : i32
    %1 = arith.extui %0 : i1 to i32
    %c0_i32_0 = arith.constant 0 : i32
    %2 = arith.cmpi ne, %1, %c0_i32_0 : i32
    scf.if %2 {
      %cst_16 = arith.constant 0.000000e+00 : f32
      %20 = vector.broadcast %cst_16 : f32 to vector<16x128xf32>
      %c0_17 = arith.constant 0 : index
      %c0_18 = arith.constant 0 : index
      %21 = vector.load %arg8[%c0_17, %c0_18] : memref<16x128xf32, #tpu.memory_space<vmem>>, vector<16x128xf32>
      tpu.vector_store %arg8[%c0_17, %c0_18], %20 {strides = array<i32>} : memref<16x128xf32, #tpu.memory_space<vmem>>, vector<16x128xf32>,
      %c0_19 = arith.constant 0 : index
      %c0_20 = arith.constant 0 : index
      %22 = vector.load %arg2[%c0_19, %c0_20] : memref<16x128xf32, #tpu.memory_space<vmem>>, vector<16x128xf32>
      %23 = arith.truncf %22 : vector<16x128xf32> to vector<16x128xbf16>
      %c0_21 = arith.constant 0 : index
      %c0_22 = arith.constant 0 : index
      %24 = vector.load %arg9[%c0_21, %c0_22] : memref<16x128xbf16, #tpu.memory_space<vmem>>, vector<16x128xbf16>
      tpu.vector_store %arg9[%c0_21, %c0_22], %23 {strides = array<i32>} : memref<16x128xbf16, #tpu.memory_space<vmem>>, vector<16x128xbf16>,
    } else {
    }
    %c0 = arith.constant 0 : index
    %c0_1 = arith.constant 0 : index
    %3 = vector.load %arg9[%c0, %c0_1] : memref<16x128xbf16, #tpu.memory_space<vmem>>, vector<16x128xbf16>
    %c0_2 = arith.constant 0 : index
    %c0_3 = arith.constant 0 : index
    %4 = vector.load %arg3[%c0_2, %c0_3] : memref<128x128xbf16, #tpu.memory_space<vmem>>, vector<128x128xbf16>
    %cst = arith.constant dense<0.000000e+00> : vector<16x128xf32>
    %5 = tpu.matmul %3, %4, %cst {dimension_numbers = #tpu.dot_dimension_numbers<[1], [0], [0], [1], [0, 0, 1, 1], [], []>} : vector<16x128xbf16>, vector<128x128xbf16>, vector<16x128xf32> -> vector<16x128xf32>
    %c0_4 = arith.constant 0 : index
    %c0_5 = arith.constant 0 : index
    %6 = vector.load %arg4[%c0_4, %c0_5] : memref<1x128xf32, #tpu.memory_space<vmem>>, vector<1x128xf32>
    %7 = vector.broadcast %6 : vector<1x128xf32> to vector<16x128xf32>
    %8 = arith.addf %5, %7 : vector<16x128xf32>
    %cst_6 = arith.constant 0.000000e+00 : f32
    %9 = vector.broadcast %cst_6 : f32 to vector<16x128xf32>
    %10 = arith.maximumf %8, %9 : vector<16x128xf32>
    %c0_7 = arith.constant 0 : index
    %c0_8 = arith.constant 0 : index
    %11 = vector.load %arg8[%c0_7, %c0_8] : memref<16x128xf32, #tpu.memory_space<vmem>>, vector<16x128xf32>
    %12 = arith.truncf %10 : vector<16x128xf32> to vector<16x128xbf16>
    %c0_9 = arith.constant 0 : index
    %c0_10 = arith.constant 0 : index
    %13 = vector.load %arg5[%c0_9, %c0_10] : memref<128x128xbf16, #tpu.memory_space<vmem>>, vector<128x128xbf16>
    %cst_11 = arith.constant dense<0.000000e+00> : vector<16x128xf32>
    %14 = tpu.matmul %12, %13, %cst_11 {dimension_numbers = #tpu.dot_dimension_numbers<[1], [0], [0], [1], [0, 0, 1, 1], [], []>} : vector<16x128xbf16>, vector<128x128xbf16>, vector<16x128xf32> -> vector<16x128xf32>
    %15 = arith.addf %11, %14 : vector<16x128xf32>
    %c0_12 = arith.constant 0 : index
    %c0_13 = arith.constant 0 : index
    %16 = vector.load %arg8[%c0_12, %c0_13] : memref<16x128xf32, #tpu.memory_space<vmem>>, vector<16x128xf32>
    tpu.vector_store %arg8[%c0_12, %c0_13], %15 {strides = array<i32>} : memref<16x128xf32, #tpu.memory_space<vmem>>, vector<16x128xf32>,
    %c0_i32_14 = arith.constant 0 : i32
    %17 = arith.cmpi eq, %arg1, %c0_i32_14 : i32
    %18 = arith.extui %17 : i1 to i32
    %c0_i32_15 = arith.constant 0 : i32
    %19 = arith.cmpi ne, %18, %c0_i32_15 : i32
    scf.if %19 {
      %c0_16 = arith.constant 0 : index
      %c0_17 = arith.constant 0 : index
      %20 = vector.load %arg8[%c0_16, %c0_17] : memref<16x128xf32, #tpu.memory_space<vmem>>, vector<16x128xf32>
      %c0_18 = arith.constant 0 : index
      %c0_19 = arith.constant 0 : index
      %21 = vector.load %arg6[%c0_18, %c0_19] : memref<1x128xf32, #tpu.memory_space<vmem>>, vector<1x128xf32>
      %22 = vector.broadcast %21 : vector<1x128xf32> to vector<16x128xf32>
      %23 = arith.addf %20, %22 : vector<16x128xf32>
      %c0_20 = arith.constant 0 : index
      %c0_21 = arith.constant 0 : index
      %24 = vector.load %arg2[%c0_20, %c0_21] : memref<16x128xf32, #tpu.memory_space<vmem>>, vector<16x128xf32>
      %25 = arith.addf %23, %24 : vector<16x128xf32>
      %c0_22 = arith.constant 0 : index
      %c0_23 = arith.constant 0 : index
      %26 = vector.load %arg7[%c0_22, %c0_23] : memref<16x128xf32, #tpu.memory_space<vmem>>, vector<16x128xf32>
      tpu.vector_store %arg7[%c0_22, %c0_23], %25 {strides = array<i32>} : memref<16x128xf32, #tpu.memory_space<vmem>>, vector<16x128xf32>,
    } else {
    }
    return
  }
  func.func @transform_0(%arg0: i32, %arg1: i32) -> (i32, i32) {
    %c0_i32 = arith.constant 0 : i32
    %c0_i32_0 = arith.constant 0 : i32
    return %arg0, %c0_i32 : i32, i32
  }
  func.func @transform_1(%arg0: i32, %arg1: i32) -> (i32, i32) {
    %c0_i32 = arith.constant 0 : i32
    %c0_i32_0 = arith.constant 0 : i32
    return %c0_i32, %arg1 : i32, i32
  }
  func.func @transform_2(%arg0: i32, %arg1: i32) -> (i32, i32) {
    %c0_i32 = arith.constant 0 : i32
    %c0_i32_0 = arith.constant 0 : i32
    return %c0_i32, %arg1 : i32, i32
  }
  func.func @transform_3(%arg0: i32, %arg1: i32) -> (i32, i32) {
    %c0_i32 = arith.constant 0 : i32
    %c0_i32_0 = arith.constant 0 : i32
    return %arg1, %c0_i32 : i32, i32
  }
  func.func @transform_4(%arg0: i32, %arg1: i32) -> (i32, i32) {
    %c0_i32 = arith.constant 0 : i32
    %c0_i32_0 = arith.constant 0 : i32
    %c0_i32_1 = arith.constant 0 : i32
    return %c0_i32, %c0_i32_0 : i32, i32
  }
  func.func @transform_5(%arg0: i32, %arg1: i32) -> (i32, i32) {
    %c0_i32 = arith.constant 0 : i32
    %c0_i32_0 = arith.constant 0 : i32
    return %arg0, %c0_i32 : i32, i32
  }
}

</mosaic_0001>

<llo_original>
// kernel: tpu_custom_call.1
$region0: #{tpu_custom_call.1}
  #allocation0 [shape = 'u32[]', space=smem, size = 0x4, offset = 0x4, fixed_abs, tag = 'smem constant byte address 0x4 - core index']
  #allocation1 [shape = 'u32[144,128]{1,0:T(1,128)}', space=vmem, size = 0x12000, scoped, tag = 'internal scratch']
  #allocation2 [shape = 'f32[16,128]{1,0:T(8,128)}', space=vmem, size = 0x2000, scoped, tag = 'scratch operand']
  #allocation3 [shape = 'bf16[16,128]{1,0:T(8,128)(2,1)}', space=vmem, size = 0x1000, scoped, tag = 'scratch operand']
  %s0 = inlined_call_operand.hbm [shape: f32[16,128], index: 0, kind: input, shape index: {}]
  %s1 = inlined_call_operand.hbm [shape: bf16[128,128], index: 1, kind: input, shape index: {}]
  %s2 = inlined_call_operand.vmem [shape: f32[1,128], index: 2, kind: input, shape index: {}]
  %s3 = inlined_call_operand.hbm [shape: bf16[128,128], index: 3, kind: input, shape index: {}]
  %s4 = inlined_call_operand.vmem [shape: f32[1,128], index: 4, kind: input, shape index: {}]
  %s5 = inlined_call_operand.hbm [shape: f32[16,128], index: 5, kind: output, shape index: {}]
  %s6 = sld [smem:[#allocation0]]
  $region50: #{tpu_custom_call.1} parent=0
    _
  %s8 = ssub.s32 1, %s6
  %s9 = scalar_select 0, %s8, %s6
  $region1: #{tpu_custom_call.1} parent=0
    #allocation4 [shape = 'u8[8192]{0}', space=vmem, size = 0x2000, scoped, tag = 'input window, operand 0, single buffered']
    #allocation5 [shape = 's32[1]{0}', space=sflag, size = 0x4, scoped, tag = 'scoped memory for tpu_custom_call.1']
    #allocation6 [shape = 's32[1]{0}', space=sflag, size = 0x4, scoped, tag = 'scoped memory for tpu_custom_call.1']
    #allocation7 [shape = 'u8[32768]{0}', space=vmem, size = 0x8000, scoped, tag = 'input window, operand 1, single buffered']
    #allocation8 [shape = 's32[1]{0}', space=sflag, size = 0x4, scoped, tag = 'scoped memory for tpu_custom_call.1']
    #allocation9 [shape = 'u8[32768]{0}', space=vmem, size = 0x8000, scoped, tag = 'input window, operand 3, single buffered']
    #allocation10 [shape = 'u8[8192]{0}', space=vmem, size = 0x2000, scoped, tag = 'output window, operand 0, single buffered']
    %10 = vsyncpa [#allocation5], 0
    %11 = vsyncpa [#allocation8], 0
    %12 = vsyncpa [#allocation6], 0
    // Predicated region
    $region2: #{tpu_custom_call.1} parent=1 // pred_check
      _
    $region3: #{tpu_custom_call.1} parent=1 // pred_check_branch
      %14 = sbr.rel (0) target = $region5
    $region4: #{tpu_custom_call.1} parent=1 // pred_region
      %s16 = ssub.s32 256, 256
      %17 = vsyncadd [#allocation5], %s16
      %s18 = sshll.u32 [#allocation4], 4
      %s19 = int_to_ptr.vmem [resolvable:$true] %s18
      %24 = dma.hbm_to_vmem [thread:$0]  %s0, 256, %s19, [#allocation5], 128, 128, 8
    $region5: #{tpu_custom_call.1} parent=1 // pred_fallthru
      _
    // Predicated region
    $region6: #{tpu_custom_call.1} parent=1 // pred_check
      _
    $region7: #{tpu_custom_call.1} parent=1 // pred_check_branch
      %26 = sbr.rel (0) target = $region9
    $region8: #{tpu_custom_call.1} parent=1 // pred_region
      %s28 = ssub.s32 1024, 1024
      %29 = vsyncadd [#allocation8], %s28
      %s30 = sshll.u32 [#allocation7], 4
      %s31 = int_to_ptr.vmem [resolvable:$true] %s30
      %36 = dma.hbm_to_vmem [thread:$0]  %s1, 1024, %s31, [#allocation8], 64, 64, 4
    $region9: #{tpu_custom_call.1} parent=1 // pred_fallthru
      _
    // Predicated region
    $region10: #{tpu_custom_call.1} parent=1 // pred_check
      _
    $region11: #{tpu_custom_call.1} parent=1 // pred_check_branch
      %38 = sbr.rel (0) target = $region13
    $region12: #{tpu_custom_call.1} parent=1 // pred_region
      _
    $region13: #{tpu_custom_call.1} parent=1 // pred_fallthru
      _
    // Predicated region
    $region14: #{tpu_custom_call.1} parent=1 // pred_check
      _
    $region15: #{tpu_custom_call.1} parent=1 // pred_check_branch
      %40 = sbr.rel (0) target = $region17
    $region16: #{tpu_custom_call.1} parent=1 // pred_region
      %s42 = ssub.s32 1024, 1024
      %43 = vsyncadd [#allocation8], %s42
      %s44 = sshll.u32 [#allocation9], 4
      %s45 = int_to_ptr.vmem [resolvable:$true] %s44
      %50 = dma.hbm_to_vmem [thread:$0]  %s3, 1024, %s45, [#allocation8], 64, 64, 4
    $region17: #{tpu_custom_call.1} parent=1 // pred_fallthru
      _
    // Predicated region
    $region18: #{tpu_custom_call.1} parent=1 // pred_check
      _
    $region19: #{tpu_custom_call.1} parent=1 // pred_check_branch
      %52 = sbr.rel (0) target = $region21
    $region20: #{tpu_custom_call.1} parent=1 // pred_region
      _
    $region21: #{tpu_custom_call.1} parent=1 // pred_fallthru
      _
    // Predicated region
    $region22: #{tpu_custom_call.1} parent=1 // pred_check
      _
    $region23: #{tpu_custom_call.1} parent=1 // pred_check_branch
      %54 = sbr.rel (0) target = $region25
    $region24: #{tpu_custom_call.1} parent=1 // pred_region
      %55 = dma.done [#allocation5], 256
    $region25: #{tpu_custom_call.1} parent=1 // pred_fallthru
      _
    // Predicated region
    $region26: #{tpu_custom_call.1} parent=1 // pred_check
      _
    $region27: #{tpu_custom_call.1} parent=1 // pred_check_branch
      %57 = sbr.rel (0) target = $region29
    $region28: #{tpu_custom_call.1} parent=1 // pred_region
      %58 = dma.done [#allocation8], 1024
    $region29: #{tpu_custom_call.1} parent=1 // pred_fallthru
      _
    // Predicated region
    $region30: #{tpu_custom_call.1} parent=1 // pred_check
      _
    $region31: #{tpu_custom_call.1} parent=1 // pred_check_branch
      %60 = sbr.rel (0) target = $region33
    $region32: #{tpu_custom_call.1} parent=1 // pred_region
      %61 = dma.done [#allocation8], 1024
    $region33: #{tpu_custom_call.1} parent=1 // pred_fallthru
      _
    %p63 = scmp.eq.s32.totalorder 0, 0
    // Predicated region
    $region34: #{tpu_custom_call.1} parent=1 // pred_check
      %p64 = pneg %p63
    $region35: #{tpu_custom_call.1} parent=1 // pred_check_branch
      %66 = sbr.rel (%p64) target = $region37
    $region36: #{tpu_custom_call.1} parent=1 // pred_region
      %67 = vst [vmem:[#allocation2] sm:$0xff] 0.0
      %68 = vst [vmem:[#allocation2 + $0x8] sm:$0xff] 0.0
      %v69 = vld [vmem:[#allocation4] sm:$0xff]
      %v70 = vld [vmem:[#allocation4 + $0x8] sm:$0xff]
      %v71 = vpack.c.bf16 %v70, %v69
      %v73 = vunpack.c.l.b16 %v71
      %v74 = vunpack.c.h.b16 %v71
      %v75 = vpack.c.b16 %v73, %v73
      %v76 = vpack.c.b16 %v74, %v74
      %79 = vst [vmem:[#allocation3] sm:$0xf] %v75
      %80 = vst [vmem:[#allocation3 + $0x4] sm:$0xf] %v76
    $region37: #{tpu_custom_call.1} parent=1 // pred_fallthru
      _
    %v81 = vld [vmem:[#allocation3] sm:$0xf]
    %v82 = vld [vmem:[#allocation3 + $0x4] sm:$0xf]
    %v83 = vld [vmem:[#allocation7] sm:$0xf]
    %v84 = vld [vmem:[#allocation7 + $0x4] sm:$0xf]
    %v85 = vld [vmem:[#allocation7 + $0x8] sm:$0xf]
    %v86 = vld [vmem:[#allocation7 + $0xc] sm:$0xf]
    %v87 = vld [vmem:[#allocation7 + $0x10] sm:$0xf]
    %v88 = vld [vmem:[#allocation7 + $0x14] sm:$0xf]
    %v89 = vld [vmem:[#allocation7 + $0x18] sm:$0xf]
    %v90 = vld [vmem:[#allocation7 + $0x1c] sm:$0xf]
    %v91 = vld [vmem:[#allocation7 + $0x20] sm:$0xf]
    %v92 = vld [vmem:[#allocation7 + $0x24] sm:$0xf]
    %v93 = vld [vmem:[#allocation7 + $0x28] sm:$0xf]
    %v94 = vld [vmem:[#allocation7 + $0x2c] sm:$0xf]
    %v95 = vld [vmem:[#allocation7 + $0x30] sm:$0xf]
    %v96 = vld [vmem:[#allocation7 + $0x34] sm:$0xf]
    %v97 = vld [vmem:[#allocation7 + $0x38] sm:$0xf]
    %v98 = vld [vmem:[#allocation7 + $0x3c] sm:$0xf]
    %v99 = vld [vmem:[%s2] sm:$0x1]
    %v101 = vlaneseq
    %v102 = vshrl.u32 %v101, 7
    %v103 = vsub.s32 0, %v102
    %v104 = vrot.slane %v99, %v103
    %v108 = vunpack.c.l.b16 %v81
    %v109 = vunpack.c.l.b16 %v82
    %v110 = vpack.c.b16 %v109, %v108
    %v128 = vunpack.c.l.b16 %v83
    %v129 = vunpack.c.l.b16 %v84
    %v130 = vunpack.c.l.b16 %v85
    %v131 = vunpack.c.l.b16 %v86
    %v132 = vunpack.c.l.b16 %v87
    %v133 = vunpack.c.l.b16 %v88
    %v134 = vunpack.c.l.b16 %v89
    %v135 = vunpack.c.l.b16 %v90
    %v136 = vunpack.c.l.b16 %v91
    %v137 = vunpack.c.l.b16 %v92
    %v138 = vunpack.c.l.b16 %v93
    %v139 = vunpack.c.l.b16 %v94
    %v140 = vunpack.c.l.b16 %v95
    %v141 = vunpack.c.l.b16 %v96
    %v142 = vunpack.c.l.b16 %v97
    %v143 = vunpack.c.l.b16 %v98
    %v144 = vpack.c.b16 %v129, %v128
    %v145 = vpack.c.b16 %v131, %v130
    %v146 = vpack.c.b16 %v133, %v132
    %v147 = vpack.c.b16 %v135, %v134
    %v148 = vpack.c.b16 %v137, %v136
    %v149 = vpack.c.b16 %v139, %v138
    %v150 = vpack.c.b16 %v141, %v140
    %v151 = vpack.c.b16 %v143, %v142
    %160 = vmatprep.subr.bf16.mxu0 0
    %161 = vmatpush1.bf16.msra.mxu0 %v151
    %162 = vmatprep.subr.bf16.mxu0 0
    %163 = vmatpush1.bf16.msra.mxu0 %v150
    %164 = vmatprep.subr.bf16.mxu0 0
    %165 = vmatpush1.bf16.msra.mxu0 %v149
    %166 = vmatprep.subr.bf16.mxu0 0
    %167 = vmatpush1.bf16.msra.mxu0 %v148
    %168 = vmatprep.subr.bf16.mxu0 0
    %169 = vmatpush1.bf16.msra.mxu0 %v147
    %170 = vmatprep.subr.bf16.mxu0 0
    %171 = vmatpush1.bf16.msra.mxu0 %v146
    %172 = vmatprep.subr.bf16.mxu0 0
    %173 = vmatpush1.bf16.msra.mxu0 %v145
    %174 = vmatprep.subr.bf16.mxu0 0
    %175 = vmatpush1.bf16.msra.mxu0 %v144
    %176 = vmatprep.subr.bf16.mxu0 0
    %177 = vmatpush2.bf16.msra.mxu0 0
    %178 = vmatprep.subr.bf16.mxu0 0
    %179 = vmatpush2.bf16.msra.mxu0 0
    %180 = vmatprep.subr.bf16.mxu0 0
    %181 = vmatpush2.bf16.msra.mxu0 0
    %182 = vmatprep.subr.bf16.mxu0 0
    %183 = vmatpush2.bf16.msra.mxu0 0
    %184 = vmatprep.subr.bf16.mxu0 0
    %185 = vmatpush2.bf16.msra.mxu0 0
    %186 = vmatprep.subr.bf16.mxu0 0
    %187 = vmatpush2.bf16.msra.mxu0 0
    %188 = vmatprep.subr.bf16.mxu0 0
    %189 = vmatpush2.bf16.msra.mxu0 0
    %190 = vmatprep.subr.bf16.mxu0 0
    %191 = vmatpush2.bf16.msra.mxu0 0
    %192 = vmatprep.mubr.bf16.mxu0 0
    %193 = vmatmul.mubr.bf16.gmra.mxu0 %v110
    %v194 = vpop.f32.mrf.mxu0
    %v195 = vadd.f32 %v104, %v194
    %v196 = vpop.f32.mrf.mxu0
    %v197 = vpop.f32.mrf.mxu0
    %v198 = vadd.f32 %v104, %v197
    %v199 = vpop.f32.mrf.mxu0
    %200 = vdwg.mxu0
    %v201 = vmax.f32 %v195, 0.0
    %v202 = vmax.f32 %v198, 0.0
    %v203 = vld [vmem:[#allocation2] sm:$0xff]
    %v204 = vld [vmem:[#allocation2 + $0x8] sm:$0xff]
    %v205 = vpack.c.bf16 %v202, %v201
    %v206 = vld [vmem:[#allocation9] sm:$0xf]
    %v207 = vld [vmem:[#allocation9 + $0x4] sm:$0xf]
    %v208 = vld [vmem:[#allocation9 + $0x8] sm:$0xf]
    %v209 = vld [vmem:[#allocation9 + $0xc] sm:$0xf]
    %v210 = vld [vmem:[#allocation9 + $0x10] sm:$0xf]
    %v211 = vld [vmem:[#allocation9 + $0x14] sm:$0xf]
    %v212 = vld [vmem:[#allocation9 + $0x18] sm:$0xf]
    %v213 = vld [vmem:[#allocation9 + $0x1c] sm:$0xf]
    %v214 = vld [vmem:[#allocation9 + $0x20] sm:$0xf]
    %v215 = vld [vmem:[#allocation9 + $0x24] sm:$0xf]
    %v216 = vld [vmem:[#allocation9 + $0x28] sm:$0xf]
    %v217 = vld [vmem:[#allocation9 + $0x2c] sm:$0xf]
    %v218 = vld [vmem:[#allocation9 + $0x30] sm:$0xf]
    %v219 = vld [vmem:[#allocation9 + $0x34] sm:$0xf]
    %v220 = vld [vmem:[#allocation9 + $0x38] sm:$0xf]
    %v221 = vld [vmem:[#allocation9 + $0x3c] sm:$0xf]
    %v238 = vunpack.c.l.b16 %v206
    %v239 = vunpack.c.l.b16 %v207
    %v240 = vunpack.c.l.b16 %v208
    %v241 = vunpack.c.l.b16 %v209
    %v242 = vunpack.c.l.b16 %v210
    %v243 = vunpack.c.l.b16 %v211
    %v244 = vunpack.c.l.b16 %v212
    %v245 = vunpack.c.l.b16 %v213
    %v246 = vunpack.c.l.b16 %v214
    %v247 = vunpack.c.l.b16 %v215
    %v248 = vunpack.c.l.b16 %v216
    %v249 = vunpack.c.l.b16 %v217
    %v250 = vunpack.c.l.b16 %v218
    %v251 = vunpack.c.l.b16 %v219
    %v252 = vunpack.c.l.b16 %v220
    %v253 = vunpack.c.l.b16 %v221
    %v254 = vpack.c.b16 %v239, %v238
    %v255 = vpack.c.b16 %v241, %v240
    %v256 = vpack.c.b16 %v243, %v242
    %v257 = vpack.c.b16 %v245, %v244
    %v258 = vpack.c.b16 %v247, %v246
    %v259 = vpack.c.b16 %v249, %v248
    %v260 = vpack.c.b16 %v251, %v250
    %v261 = vpack.c.b16 %v253, %v252
    %270 = vmatprep.subr.bf16.mxu0 0
    %271 = vmatpush1.bf16.msra.mxu0 %v261
    %272 = vmatprep.subr.bf16.mxu0 0
    %273 = vmatpush1.bf16.msra.mxu0 %v260
    %274 = vmatprep.subr.bf16.mxu0 0
    %275 = vmatpush1.bf16.msra.mxu0 %v259
    %276 = vmatprep.subr.bf16.mxu0 0
    %277 = vmatpush1.bf16.msra.mxu0 %v258
    %278 = vmatprep.subr.bf16.mxu0 0
    %279 = vmatpush1.bf16.msra.mxu0 %v257
    %280 = vmatprep.subr.bf16.mxu0 0
    %281 = vmatpush1.bf16.msra.mxu0 %v256
    %282 = vmatprep.subr.bf16.mxu0 0
    %283 = vmatpush1.bf16.msra.mxu0 %v255
    %284 = vmatprep.subr.bf16.mxu0 0
    %285 = vmatpush1.bf16.msra.mxu0 %v254
    %286 = vmatprep.subr.bf16.mxu0 0
    %287 = vmatpush2.bf16.msra.mxu0 0
    %288 = vmatprep.subr.bf16.mxu0 0
    %289 = vmatpush2.bf16.msra.mxu0 0
    %290 = vmatprep.subr.bf16.mxu0 0
    %291 = vmatpush2.bf16.msra.mxu0 0
    %292 = vmatprep.subr.bf16.mxu0 0
    %293 = vmatpush2.bf16.msra.mxu0 0
    %294 = vmatprep.subr.bf16.mxu0 0
    %295 = vmatpush2.bf16.msra.mxu0 0
    %296 = vmatprep.subr.bf16.mxu0 0
    %297 = vmatpush2.bf16.msra.mxu0 0
    %298 = vmatprep.subr.bf16.mxu0 0
    %299 = vmatpush2.bf16.msra.mxu0 0
    %300 = vmatprep.subr.bf16.mxu0 0
    %301 = vmatpush2.bf16.msra.mxu0 0
    %302 = vmatprep.mubr.bf16.mxu0 0
    %303 = vmatmul.mubr.bf16.gmra.mxu0 %v205
    %v304 = vpop.f32.mrf.mxu0
    %v305 = vadd.f32 0.0, %v304
    %v306 = vpop.f32.mrf.mxu0
    %v307 = vpop.f32.mrf.mxu0
    %v308 = vadd.f32 0.0, %v307
    %v309 = vpop.f32.mrf.mxu0
    %310 = vdwg.mxu0
    %v311 = vadd.f32 %v203, %v305
    %v312 = vadd.f32 %v204, %v308
    %313 = vst [vmem:[#allocation2] sm:$0xff] %v311
    %314 = vst [vmem:[#allocation2 + $0x8] sm:$0xff] %v312
    // Predicated region
    $region38: #{tpu_custom_call.1} parent=1 // pred_check
      %p315 = pneg %p63
    $region39: #{tpu_custom_call.1} parent=1 // pred_check_branch
      %317 = sbr.rel (%p315) target = $region41
    $region40: #{tpu_custom_call.1} parent=1 // pred_region
      %v318 = vld [vmem:[#allocation2] sm:$0xff]
      %v319 = vld [vmem:[#allocation2 + $0x8] sm:$0xff]
      %v320 = vld [vmem:[%s4] sm:$0x1]
      %v322 = vlaneseq
      %v323 = vshrl.u32 %v322, 7
      %v324 = vsub.s32 0, %v323
      %v325 = vrot.slane %v320, %v324
      %v327 = vadd.f32 %v318, %v325
      %v328 = vadd.f32 %v319, %v325
      %v329 = vld [vmem:[#allocation4] sm:$0xff]
      %v330 = vld [vmem:[#allocation4 + $0x8] sm:$0xff]
      %v331 = vadd.f32 %v327, %v329
      %v332 = vadd.f32 %v328, %v330
      %333 = vst [vmem:[#allocation10] sm:$0xff] %v331
      %334 = vst [vmem:[#allocation10 + $0x8] sm:$0xff] %v332
    $region41: #{tpu_custom_call.1} parent=1 // pred_fallthru
      _
    // Predicated region
    $region42: #{tpu_custom_call.1} parent=1 // pred_check
      _
    $region43: #{tpu_custom_call.1} parent=1 // pred_check_branch
      %336 = sbr.rel (0) target = $region45
    $region44: #{tpu_custom_call.1} parent=1 // pred_region
      %s338 = ssub.s32 256, 256
      %339 = vsyncadd [#allocation6], %s338
      %s340 = sshll.u32 [#allocation10], 4
      %s341 = int_to_ptr.vmem [resolvable:$true] %s340
      %346 = dma.vmem_to_hbm [thread:$0]  %s341, 256, %s5, [#allocation6], 128, 128, 8
    $region45: #{tpu_custom_call.1} parent=1 // pred_fallthru
      _
    // Predicated region
    $region46: #{tpu_custom_call.1} parent=1 // pred_check
      _
    $region47: #{tpu_custom_call.1} parent=1 // pred_check_branch
      %348 = sbr.rel (0) target = $region49
    $region48: #{tpu_custom_call.1} parent=1 // pred_region
      %349 = dma.done [#allocation6], 256
    $region49: #{tpu_custom_call.1} parent=1 // pred_fallthru
      _
    %350 = vsyncpa [#allocation5], 1
    %351 = vsyncpa [#allocation8], 1
    %352 = vsyncpa [#allocation6], 1

</llo_original>
